<compile_context>
chip_gen: v6e
topology: v6e:2x2x1
jax: 0.10.0
libtpu: 0.0.40
codegen_flags: <defaults>
</compile_context>

<pallas_src>
import functools
import math

import jax
import jax.numpy as jnp
from jax import lax
from jax.experimental import pallas as pl
from jax.experimental.pallas import tpu as pltpu


def _round_up(x, m):
    return ((x + m - 1) // m) * m


# ---------------------------------------------------------------------------
# Dense (Linear) kernel:  y = x @ W^T + b,   W in torch (out, in) layout.
# ---------------------------------------------------------------------------
def _dense_kernel(x_ref, w_ref, b_ref, o_ref):
    # x_ref: (TM, K)   w_ref: (N, K)   b_ref: (1, N) f32   o_ref: (TM, N)
    acc = lax.dot_general(
        x_ref[...], w_ref[...],
        dimension_numbers=(((1,), (1,)), ((), ())),   # contract K of both => x @ W^T
        preferred_element_type=jnp.float32,
    )
    o_ref[...] = (acc + b_ref[...]).astype(o_ref.dtype)
    # TODO(synk): training-mode dropout on the dense output is not implemented;
    # eval-mode dropout is the identity, which is what this reproduces.


# Resolved on first call: whether memory_space-only (resident VMEM) BlockSpecs
# for the constant weight/bias are supported by this JAX version.
_RESIDENT_PARAM_SPECS_SUPPORTED = None


def _build_dense_call(m_pad, K, N, tile_m, out_dtype, vmem_limit, resident_params):
    if resident_params:
        # Single resident copy of the (grid-constant) weight and bias in VMEM:
        # no per-step window, no double-buffer => saves a full HxN VMEM buffer.
        w_spec = pl.BlockSpec(memory_space=pltpu.MemorySpace.VMEM)
        b_spec = pl.BlockSpec(memory_space=pltpu.MemorySpace.VMEM)
    else:
        w_spec = pl.BlockSpec((N, K), lambda i: (0, 0))
        b_spec = pl.BlockSpec((1, N), lambda i: (0, 0))
    return pl.pallas_call(
        _dense_kernel,
        out_shape=jax.ShapeDtypeStruct((m_pad, N), out_dtype),
        grid_spec=pltpu.PrefetchScalarGridSpec(
            num_scalar_prefetch=0,
            grid=(m_pad // tile_m,),
            in_specs=[
                pl.BlockSpec((tile_m, K), lambda i: (i, 0)),   # activation tile
                w_spec,                                         # full weight
                b_spec,                                         # bias row (f32)
            ],
            out_specs=pl.BlockSpec((tile_m, N), lambda i: (i, 0)),
        ),
        compiler_params=pltpu.CompilerParams(
            dimension_semantics=("parallel",),      # shard M across TCs (v7x megacore)
            vmem_limit_bytes=vmem_limit,
        ),
    )


def dense(x2d, weight, bias, *, tile_m=None):
    """x2d: (M, K); weight: (N, K) torch (out, in); bias: (N,).  Returns (M, N)."""
    global _RESIDENT_PARAM_SPECS_SUPPORTED

    M, K = x2d.shape
    N, K2 = weight.shape
    assert K2 == K, (weight.shape, x2d.shape)
    out_dtype = x2d.dtype

    # MXU-aligned M tile; pad M so the grid divides evenly (BEiT's S=197 does not).
    if tile_m is None:
        tile_m = 256 if M >= 256 else _round_up(M, 8)
    tile_m = max(8, _round_up(int(tile_m), 8))
    m_pad = _round_up(M, tile_m)
    x_pad = jnp.pad(x2d, ((0, m_pad - M), (0, 0))) if m_pad != M else x2d

    # Hoist the bias cast/reshape out of the per-tile hot path.
    bias_f32 = bias.astype(jnp.float32).reshape(1, N)

    # VMEM budget: 2x activation tile + 2x output tile (double-buffered) +
    # one resident weight + bias, with headroom; capped < v7x 64 MiB physical.
    x_b = tile_m * K * jnp.dtype(x2d.dtype).itemsize
    o_b = tile_m * N * jnp.dtype(out_dtype).itemsize
    w_b = N * K * jnp.dtype(weight.dtype).itemsize
    needed = 2 * x_b + 2 * o_b + w_b + 8 * N
    vmem_limit = int(min(max(2 * needed + (8 << 20), 32 << 20), 56 << 20))

    args = (x_pad, weight, bias_f32)
    if _RESIDENT_PARAM_SPECS_SUPPORTED is None:
        try:
            out = _build_dense_call(m_pad, K, N, tile_m, out_dtype, vmem_limit, True)(*args)
            out = jax.block_until_ready(out)
            _RESIDENT_PARAM_SPECS_SUPPORTED = True
        except Exception:
            _RESIDENT_PARAM_SPECS_SUPPORTED = False
            out = _build_dense_call(m_pad, K, N, tile_m, out_dtype, vmem_limit, False)(*args)
    else:
        out = _build_dense_call(
            m_pad, K, N, tile_m, out_dtype, vmem_limit, _RESIDENT_PARAM_SPECS_SUPPORTED
        )(*args)

    return out[:M] if m_pad != M else out


# ---------------------------------------------------------------------------
# Per-head attention kernel:  softmax(q k^T * scale) @ v   for one (batch, head).
# ---------------------------------------------------------------------------
def _attention_kernel(q_ref, k_ref, v_ref, o_ref, *, scale):
    # refs: (1, S, D) blocks for one head.
    q = q_ref[0].astype(jnp.float32)          # (S, D)
    k = k_ref[0].astype(jnp.float32)          # (S, D)
    v = v_ref[0].astype(jnp.float32)          # (S, D)

    scores = lax.dot_general(
        q, k, dimension_numbers=(((1,), (1,)), ((), ())),   # q @ k^T -> (S, S)
        preferred_element_type=jnp.float32,
    ) * scale

    s_max = jnp.max(scores, axis=-1, keepdims=True)
    p = jnp.exp(scores - s_max)
    probs = p / jnp.sum(p, axis=-1, keepdims=True)
    # TODO(synk): training-mode dropout on attention probs not implemented
    # (eval-mode dropout is the identity).

    ctx = jnp.dot(probs, v, preferred_element_type=jnp.float32)   # (S, D)
    o_ref[0] = ctx.astype(o_ref.dtype)


def _attention(q, k, v, *, scale):
    """q, k, v: (B*NH, S, D)  ->  context: (B*NH, S, D)."""
    BH, S, D = q.shape
    kernel = functools.partial(_attention_kernel, scale=scale)
    head_spec = pl.BlockSpec((1, S, D), lambda h: (h, 0, 0))
    return pl.pallas_call(
        kernel,
        out_shape=jax.ShapeDtypeStruct((BH, S, D), q.dtype),
        grid_spec=pltpu.PrefetchScalarGridSpec(
            num_scalar_prefetch=0,
            grid=(BH,),
            in_specs=[head_spec, head_spec, head_spec],
            out_specs=head_spec,
        ),
        compiler_params=pltpu.CompilerParams(
            dimension_semantics=("parallel",),
        ),
    )(q, k, v)


# ---------------------------------------------------------------------------
# Full BeitAttention forward.
# ---------------------------------------------------------------------------
def beit_attention(hidden_states, params, *, num_heads, tile_m=None):
    """hidden_states: (B, S, H); params: dict with wq,bq,wk,bk,wv,bv,wo,bo
    (weights torch-style (out, in))."""
    B, S, H = hidden_states.shape
    assert H % num_heads == 0
    D = H // num_heads
    x2d = hidden_states.reshape(B * S, H)

    # Fused QKV projection: pack weights so x is read from HBM once and the
    # output is lane-dense (3H wide).  In a real deployment pre-pack the
    # weights once at load time instead of per call.
    w_qkv = jnp.concatenate([params["wq"], params["wk"], params["wv"]], axis=0)  # (3H, H)
    b_qkv = jnp.concatenate([params["bq"], params["bk"], params["bv"]])          # (3H,)
    qkv = dense(x2d, w_qkv, b_qkv, tile_m=tile_m)                                # (M, 3H)
    q2d, k2d, v2d = jnp.split(qkv, 3, axis=-1)

    def to_heads(t):   # (M, H) -> (B*NH, S, D)
        return (t.reshape(B, S, num_heads, D)
                 .transpose(0, 2, 1, 3)
                 .reshape(B * num_heads, S, D))

    ctx = _attention(to_heads(q2d), to_heads(k2d), to_heads(v2d),
                     scale=1.0 / math.sqrt(D))                                   # (B*NH, S, D)
    ctx = (ctx.reshape(B, num_heads, S, D)
              .transpose(0, 2, 1, 3)
              .reshape(B * S, H))

    out = dense(ctx, params["wo"], params["bo"], tile_m=tile_m)                  # (M, H)
    return out.reshape(B, S, H)


# ---------------------------------------------------------------------------
# Pure-JAX reference (eval-mode dropout == identity).
# ---------------------------------------------------------------------------
def _reference(x, p, num_heads):
    B, S, H = x.shape
    D = H // num_heads
    q = x @ p["wq"].T + p["bq"]
    k = x @ p["wk"].T + p["bk"]
    v = x @ p["wv"].T + p["bv"]

    def heads(t):
        return t.reshape(B, S, num_heads, D).transpose(0, 2, 1, 3)

    qh, kh, vh = heads(q), heads(k), heads(v)
    scores = jnp.einsum("bhqd,bhkd->bhqk", qh, kh) / math.sqrt(D)
    probs = jax.nn.softmax(scores, axis=-1)
    ctx = jnp.einsum("bhqk,bhkd->bhqd", probs, vh)
    ctx = ctx.transpose(0, 2, 1, 3).reshape(B, S, H)
    return ctx @ p["wo"].T + p["bo"]


if __name__ == "__main__":
    # Small shapes consistent with the module: batch=2, seq=8, hidden=32, 4 heads.
    B, S, H, NH = 2, 8, 32, 4
    key = jax.random.PRNGKey(0)
    keys = jax.random.split(key, 9)
    bound = 1.0 / math.sqrt(H)

    def linear_params(kw, kb, out_f, in_f):
        w = jax.random.uniform(kw, (out_f, in_f), minval=-bound, maxval=bound,
                               dtype=jnp.float32)
        b = jax.random.uniform(kb, (out_f,), minval=-bound, maxval=bound,
                               dtype=jnp.float32)
        return w, b

    x = jax.random.normal(keys[0], (B, S, H), dtype=jnp.float32)
    wq, bq = linear_params(keys[1], keys[2], H, H)
    wk, bk = linear_params(keys[3], keys[4], H, H)
    wv, bv = linear_params(keys[5], keys[6], H, H)
    wo, bo = linear_params(keys[7], keys[8], H, H)
    params = dict(wq=wq, bq=bq, wk=wk, bk=bk, wv=wv, bv=bv, wo=wo, bo=bo)

    out = beit_attention(x, params, num_heads=NH)
    out = jax.block_until_ready(out)

    ref = _reference(x, params, NH)
    assert out.shape == (B, S, H)
    err = float(jnp.max(jnp.abs(out - ref)))
    assert jnp.allclose(out, ref, atol=1e-4, rtol=1e-4), f"max abs err {err}"

    print("KERNEL_OK")
</pallas_src>

<mosaic_0001>
module attributes {stable_mosaic.version = 11 : i64} {
  func.func @_dense_kernel(%arg0: i32, %arg1: memref<16x32xf32, #tpu.memory_space<vmem>>, %arg2: memref<96x32xf32, #tpu.memory_space<vmem>>, %arg3: memref<1x96xf32, #tpu.memory_space<vmem>>, %arg4: memref<16x96xf32, #tpu.memory_space<vmem>>) attributes {dimension_semantics = [#tpu.dimension_semantics<parallel>], iteration_bounds = array<i64: 1>, scalar_prefetch = 0 : i64, scratch_operands = 0 : i64, tpu.core_type = #tpu.core_type<tc>, window_params = [{transform_indices = @transform_0, window_bounds = array<i64: 16, 32>}, {pipeline_mode = #tpu.pipeline_mode<synchronous>, transform_indices = @transform_1, window_bounds = array<i64: 96, 32>}, {pipeline_mode = #tpu.pipeline_mode<synchronous>, transform_indices = @transform_2, window_bounds = array<i64: 1, 96>}, {transform_indices = @transform_3, window_bounds = array<i64: 16, 96>}]} {
    %c0 = arith.constant 0 : index
    %c0_0 = arith.constant 0 : index
    %0 = vector.load %arg1[%c0, %c0_0] : memref<16x32xf32, #tpu.memory_space<vmem>>, vector<16x32xf32>
    %c0_1 = arith.constant 0 : index
    %c0_2 = arith.constant 0 : index
    %1 = vector.load %arg2[%c0_1, %c0_2] : memref<96x32xf32, #tpu.memory_space<vmem>>, vector<96x32xf32>
    %cst = arith.constant dense<0.000000e+00> : vector<16x96xf32>
    %2 = tpu.matmul %0, %1, %cst {dimension_numbers = #tpu.dot_dimension_numbers<[1], [1], [0], [0], [0, 0, 1, 0], [], []>} : vector<16x32xf32>, vector<96x32xf32>, vector<16x96xf32> -> vector<16x96xf32>
    %c0_3 = arith.constant 0 : index
    %c0_4 = arith.constant 0 : index
    %3 = vector.load %arg3[%c0_3, %c0_4] : memref<1x96xf32, #tpu.memory_space<vmem>>, vector<1x96xf32>
    %4 = vector.broadcast %3 : vector<1x96xf32> to vector<16x96xf32>
    %5 = arith.addf %2, %4 : vector<16x96xf32>
    %c0_5 = arith.constant 0 : index
    %c0_6 = arith.constant 0 : index
    %6 = vector.load %arg4[%c0_5, %c0_6] : memref<16x96xf32, #tpu.memory_space<vmem>>, vector<16x96xf32>
    tpu.vector_store %arg4[%c0_5, %c0_6], %5 {strides = array<i32>} : memref<16x96xf32, #tpu.memory_space<vmem>>, vector<16x96xf32>,
    return
  }
  func.func @transform_0(%arg0: i32) -> (i32, i32) {
    %c0_i32 = arith.constant 0 : i32
    %c0_i32_0 = arith.constant 0 : i32
    return %arg0, %c0_i32 : i32, i32
  }
  func.func @transform_1(%arg0: i32) -> (i32, i32) {
    %c0_i32 = arith.constant 0 : i32
    %c0_i32_0 = arith.constant 0 : i32
    %c0_i32_1 = arith.constant 0 : i32
    return %c0_i32, %c0_i32_0 : i32, i32
  }
  func.func @transform_2(%arg0: i32) -> (i32, i32) {
    %c0_i32 = arith.constant 0 : i32
    %c0_i32_0 = arith.constant 0 : i32
    %c0_i32_1 = arith.constant 0 : i32
    return %c0_i32, %c0_i32_0 : i32, i32
  }
  func.func @transform_3(%arg0: i32) -> (i32, i32) {
    %c0_i32 = arith.constant 0 : i32
    %c0_i32_0 = arith.constant 0 : i32
    return %arg0, %c0_i32 : i32, i32
  }
}

module attributes {stable_mosaic.version = 11 : i64} {
  func.func @_dense_kernel(%arg0: i32, %arg1: memref<16x32xf32, #tpu.memory_space<vmem>>, %arg2: memref<96x32xf32, #tpu.memory_space<vmem>>, %arg3: memref<1x96xf32, #tpu.memory_space<vmem>>, %arg4: memref<16x96xf32, #tpu.memory_space<vmem>>) attributes {dimension_semantics = [#tpu.dimension_semantics<parallel>], iteration_bounds = array<i64: 1>, scalar_prefetch = 0 : i64, scratch_operands = 0 : i64, tpu.core_type = #tpu.core_type<tc>, window_params = [{transform_indices = @transform_0, window_bounds = array<i64: 16, 32>}, {pipeline_mode = #tpu.pipeline_mode<synchronous>, transform_indices = @transform_1, window_bounds = array<i64: 96, 32>}, {pipeline_mode = #tpu.pipeline_mode<synchronous>, transform_indices = @transform_2, window_bounds = array<i64: 1, 96>}, {transform_indices = @transform_3, window_bounds = array<i64: 16, 96>}]} {
    %c0 = arith.constant 0 : index
    %c0_0 = arith.constant 0 : index
    %0 = vector.load %arg1[%c0, %c0_0] : memref<16x32xf32, #tpu.memory_space<vmem>>, vector<16x32xf32>
    %c0_1 = arith.constant 0 : index
    %c0_2 = arith.constant 0 : index
    %1 = vector.load %arg2[%c0_1, %c0_2] : memref<96x32xf32, #tpu.memory_space<vmem>>, vector<96x32xf32>
    %cst = arith.constant dense<0.000000e+00> : vector<16x96xf32>
    %2 = tpu.matmul %0, %1, %cst {dimension_numbers = #tpu.dot_dimension_numbers<[1], [1], [0], [0], [0, 0, 1, 0], [], []>} : vector<16x32xf32>, vector<96x32xf32>, vector<16x96xf32> -> vector<16x96xf32>
    %c0_3 = arith.constant 0 : index
    %c0_4 = arith.constant 0 : index
    %3 = vector.load %arg3[%c0_3, %c0_4] : memref<1x96xf32, #tpu.memory_space<vmem>>, vector<1x96xf32>
    %4 = vector.broadcast %3 : vector<1x96xf32> to vector<16x96xf32>
    %5 = arith.addf %2, %4 : vector<16x96xf32>
    %c0_5 = arith.constant 0 : index
    %c0_6 = arith.constant 0 : index
    %6 = vector.load %arg4[%c0_5, %c0_6] : memref<16x96xf32, #tpu.memory_space<vmem>>, vector<16x96xf32>
    tpu.vector_store %arg4[%c0_5, %c0_6], %5 {strides = array<i32>} : memref<16x96xf32, #tpu.memory_space<vmem>>, vector<16x96xf32>,
    return
  }
  func.func @transform_0(%arg0: i32) -> (i32, i32) {
    %c0_i32 = arith.constant 0 : i32
    %c0_i32_0 = arith.constant 0 : i32
    return %arg0, %c0_i32 : i32, i32
  }
  func.func @transform_1(%arg0: i32) -> (i32, i32) {
    %c0_i32 = arith.constant 0 : i32
    %c0_i32_0 = arith.constant 0 : i32
    %c0_i32_1 = arith.constant 0 : i32
    return %c0_i32, %c0_i32_0 : i32, i32
  }
  func.func @transform_2(%arg0: i32) -> (i32, i32) {
    %c0_i32 = arith.constant 0 : i32
    %c0_i32_0 = arith.constant 0 : i32
    %c0_i32_1 = arith.constant 0 : i32
    return %c0_i32, %c0_i32_0 : i32, i32
  }
  func.func @transform_3(%arg0: i32) -> (i32, i32) {
    %c0_i32 = arith.constant 0 : i32
    %c0_i32_0 = arith.constant 0 : i32
    return %arg0, %c0_i32 : i32, i32
  }
}

</mosaic_0001>

<llo_original>
// kernel: tpu_custom_call.1
$region0: #{tpu_custom_call.1}
  #allocation0 [shape = 'u32[]', space=smem, size = 0x4, offset = 0x4, fixed_abs, tag = 'smem constant byte address 0x4 - core index']
  #allocation1 [shape = 'u32[144,128]{1,0:T(1,128)}', space=vmem, size = 0x12000, scoped, tag = 'internal scratch']
  %s0 = inlined_call_operand.vmem [shape: f32[16,32], index: 0, kind: input, shape index: {}]
  %s1 = inlined_call_operand.vmem [shape: f32[96,32], index: 1, kind: input, shape index: {}]
  %s2 = inlined_call_operand.vmem [shape: f32[1,96], index: 2, kind: input, shape index: {}]
  %s3 = inlined_call_operand.hbm [shape: f32[16,96], index: 3, kind: output, shape index: {}]
  %s4 = sld [smem:[#allocation0]]
  $region22: #{tpu_custom_call.1} parent=0
    _
  %s6 = ssub.s32 1, %s4
  %s7 = scalar_select 0, %s6, %s4
  $region1: #{tpu_custom_call.1} parent=0
    #allocation2 [shape = 'u8[8192]{0}', space=vmem, size = 0x2000, scoped, tag = 'output window, operand 0, single buffered']
    #allocation3 [shape = 's32[1]{0}', space=sflag, size = 0x4, scoped, tag = 'scoped memory for tpu_custom_call.1']
    %8 = vsyncpa [#allocation3], 0
    // Predicated region
    $region2: #{tpu_custom_call.1} parent=1 // pred_check
      _
    $region3: #{tpu_custom_call.1} parent=1 // pred_check_branch
      %10 = sbr.rel (0) target = $region5
    $region4: #{tpu_custom_call.1} parent=1 // pred_region
      _
    $region5: #{tpu_custom_call.1} parent=1 // pred_fallthru
      _
    // Predicated region
    $region6: #{tpu_custom_call.1} parent=1 // pred_check
      _
    $region7: #{tpu_custom_call.1} parent=1 // pred_check_branch
      %12 = sbr.rel (0) target = $region9
    $region8: #{tpu_custom_call.1} parent=1 // pred_region
      _
    $region9: #{tpu_custom_call.1} parent=1 // pred_fallthru
      _
    // Predicated region
    $region10: #{tpu_custom_call.1} parent=1 // pred_check
      _
    $region11: #{tpu_custom_call.1} parent=1 // pred_check_branch
      %14 = sbr.rel (0) target = $region13
    $region12: #{tpu_custom_call.1} parent=1 // pred_region
      _
    $region13: #{tpu_custom_call.1} parent=1 // pred_fallthru
      _
    %v15 = vld [vmem:[%s0] sm:$0xff]
    %v16 = vld [vmem:[%s0 + $0x8] sm:$0xff]
    %v17 = vld [vmem:[%s1] sm:$0xff]
    %v18 = vld [vmem:[%s1 + $0x8] sm:$0xff]
    %v19 = vld [vmem:[%s1 + $0x10] sm:$0xff]
    %v20 = vld [vmem:[%s1 + $0x18] sm:$0xff]
    %v21 = vld [vmem:[%s1 + $0x20] sm:$0xff]
    %v22 = vld [vmem:[%s1 + $0x28] sm:$0xff]
    %v23 = vld [vmem:[%s1 + $0x30] sm:$0xff]
    %v24 = vld [vmem:[%s1 + $0x38] sm:$0xff]
    %v25 = vld [vmem:[%s1 + $0x40] sm:$0xff]
    %v26 = vld [vmem:[%s1 + $0x48] sm:$0xff]
    %v27 = vld [vmem:[%s1 + $0x50] sm:$0xff]
    %v28 = vld [vmem:[%s1 + $0x58] sm:$0xff]
    %v29 = vld [vmem:[%s2] sm:$0x1]
    %v31 = vlaneseq
    %v32 = vshrl.u32 %v31, 7
    %v33 = vsub.s32 0, %v32
    %v34 = vrot.slane %v29, %v33
    %vm36 = vcmask 261120
    %v38 = vsel %vm36, %v15, 0
    %v41 = vsel %vm36, %v16, 0
    %v44 = vsel %vm36, %v17, 0
    %v47 = vsel %vm36, %v18, 0
    %v50 = vsel %vm36, %v19, 0
    %v53 = vsel %vm36, %v20, 0
    %v56 = vsel %vm36, %v21, 0
    %v59 = vsel %vm36, %v22, 0
    %v62 = vsel %vm36, %v23, 0
    %v65 = vsel %vm36, %v24, 0
    %v68 = vsel %vm36, %v25, 0
    %v71 = vsel %vm36, %v26, 0
    %v74 = vsel %vm36, %v27, 0
    %v77 = vsel %vm36, %v28, 0
    %79 = vmatprep.subr.mxu0 0.0
    %80 = vmatpush1.xpose.msra.mxu0 0.0
    %81 = vmatprep.subr.mxu0 0.0
    %82 = vmatpush1.xpose.msra.mxu0 0.0
    %83 = vmatprep.subr.mxu0 0.0
    %84 = vmatpush1.xpose.msra.mxu0 0.0
    %85 = vmatprep.subr.mxu0 0.0
    %86 = vmatpush1.xpose.msra.mxu0 0.0
    %87 = vmatprep.subr.mxu0 0.0
    %88 = vmatpush1.xpose.msra.mxu0 %v77
    %89 = vmatprep.subr.mxu0 0.0
    %90 = vmatpush1.xpose.msra.mxu0 %v74
    %91 = vmatprep.subr.mxu0 0.0
    %92 = vmatpush1.xpose.msra.mxu0 %v71
    %93 = vmatprep.subr.mxu0 0.0
    %94 = vmatpush1.xpose.msra.mxu0 %v68
    %95 = vmatprep.subr.mxu0 0.0
    %96 = vmatpush1.xpose.msra.mxu0 %v65
    %97 = vmatprep.subr.mxu0 0.0
    %98 = vmatpush1.xpose.msra.mxu0 %v62
    %99 = vmatprep.subr.mxu0 0.0
    %100 = vmatpush1.xpose.msra.mxu0 %v59
    %101 = vmatprep.subr.mxu0 0.0
    %102 = vmatpush1.xpose.msra.mxu0 %v56
    %103 = vmatprep.subr.mxu0 0.0
    %104 = vmatpush1.xpose.msra.mxu0 %v53
    %105 = vmatprep.subr.mxu0 0.0
    %106 = vmatpush1.xpose.msra.mxu0 %v50
    %107 = vmatprep.subr.mxu0 0.0
    %108 = vmatpush1.xpose.msra.mxu0 %v47
    %109 = vmatprep.subr.mxu0 0.0
    %110 = vmatpush1.xpose.msra.mxu0 %v44
    %111 = vmatprep.subr.mxu0 0.0
    %112 = vmatpush2.xpose.msra.mxu0 0.0
    %113 = vmatprep.subr.mxu0 0.0
    %114 = vmatpush2.xpose.msra.mxu0 0.0
    %115 = vmatprep.subr.mxu0 0.0
    %116 = vmatpush2.xpose.msra.mxu0 0.0
    %117 = vmatprep.subr.mxu0 0.0
    %118 = vmatpush2.xpose.msra.mxu0 0.0
    %119 = vmatprep.subr.mxu0 0.0
    %120 = vmatpush2.xpose.msra.mxu0 0.0
    %121 = vmatprep.subr.mxu0 0.0
    %122 = vmatpush2.xpose.msra.mxu0 0.0
    %123 = vmatprep.subr.mxu0 0.0
    %124 = vmatpush2.xpose.msra.mxu0 0.0
    %125 = vmatprep.subr.mxu0 0.0
    %126 = vmatpush2.xpose.msra.mxu0 0.0
    %127 = vmatprep.subr.mxu0 0.0
    %128 = vmatpush2.xpose.msra.mxu0 0.0
    %129 = vmatprep.subr.mxu0 0.0
    %130 = vmatpush2.xpose.msra.mxu0 0.0
    %131 = vmatprep.subr.mxu0 0.0
    %132 = vmatpush2.xpose.msra.mxu0 0.0
    %133 = vmatprep.subr.mxu0 0.0
    %134 = vmatpush2.xpose.msra.mxu0 0.0
    %135 = vmatprep.subr.mxu0 0.0
    %136 = vmatpush2.xpose.msra.mxu0 0.0
    %137 = vmatprep.subr.mxu0 0.0
    %138 = vmatpush2.xpose.msra.mxu0 0.0
    %139 = vmatprep.subr.mxu0 0.0
    %140 = vmatpush2.xpose.msra.mxu0 0.0
    %141 = vmatprep.subr.mxu0 0.0
    %142 = vmatpush2.xpose.msra.mxu0 0.0
    %143 = vmatprep.mubr.f32.mxu0 0.0
    %144 = vmatmul.mubr.f32.gmra.mxu0 %v38
    %v145 = vpop.f32.mrf.mxu0
    %v146 = vadd.f32 %v34, %v145
    %v147 = vpop.f32.mrf.mxu0
    %148 = vmatprep.mubr.f32.mxu0 0.0
    %149 = vmatmul.mubr.f32.gmra.mxu0 %v41
    %v150 = vpop.f32.mrf.mxu0
    %v151 = vadd.f32 %v34, %v150
    %v152 = vpop.f32.mrf.mxu0
    %153 = vdwg.mxu0
    %vm154 = vcmask 785408
    %155 = vst.msk [vmem:[#allocation2] sm:$0xff] %vm154, %v146
    %156 = vst.msk [vmem:[#allocation2 + $0x8] sm:$0xff] %vm154, %v151
    // Predicated region
    $region14: #{tpu_custom_call.1} parent=1 // pred_check
      _
    $region15: #{tpu_custom_call.1} parent=1 // pred_check_branch
      %158 = sbr.rel (0) target = $region17
    $region16: #{tpu_custom_call.1} parent=1 // pred_region
      %s160 = ssub.s32 256, 256
      %161 = vsyncadd [#allocation3], %s160
      %s162 = sshll.u32 [#allocation2], 4
      %s163 = int_to_ptr.vmem [resolvable:$true] %s162
      %168 = dma.vmem_to_hbm [thread:$0]  %s163, 256, %s3, [#allocation3], 128, 128, 8
    $region17: #{tpu_custom_call.1} parent=1 // pred_fallthru
      _
    // Predicated region
    $region18: #{tpu_custom_call.1} parent=1 // pred_check
      _
    $region19: #{tpu_custom_call.1} parent=1 // pred_check_branch
      %170 = sbr.rel (0) target = $region21
    $region20: #{tpu_custom_call.1} parent=1 // pred_region
      %171 = dma.done [#allocation3], 256
    $region21: #{tpu_custom_call.1} parent=1 // pred_fallthru
      _
    %172 = vsyncpa [#allocation3], 1

// kernel: tpu_custom_call.1
$region0: #{tpu_custom_call.1}
  #allocation0 [shape = 'u32[]', space=smem, size = 0x4, offset = 0x4, fixed_abs, tag = 'smem constant byte address 0x4 - core index']
  #allocation1 [shape = 'u32[144,128]{1,0:T(1,128)}', space=vmem, size = 0x12000, scoped, tag = 'internal scratch']
  %s0 = inlined_call_operand.vmem [shape: f32[16,32], index: 0, kind: input, shape index: {}]
  %s1 = inlined_call_operand.vmem [shape: f32[96,32], index: 1, kind: input, shape index: {}]
  %s2 = inlined_call_operand.vmem [shape: f32[1,96], index: 2, kind: input, shape index: {}]
  %s3 = inlined_call_operand.hbm [shape: f32[16,96], index: 3, kind: output, shape index: {}]
  %s4 = sld [smem:[#allocation0]]
  $region22: #{tpu_custom_call.1} parent=0
    _
  %s6 = ssub.s32 1, %s4
  %s7 = scalar_select 0, %s6, %s4
  $region1: #{tpu_custom_call.1} parent=0
    #allocation2 [shape = 'u8[8192]{0}', space=vmem, size = 0x2000, scoped, tag = 'output window, operand 0, single buffered']
    #allocation3 [shape = 's32[1]{0}', space=sflag, size = 0x4, scoped, tag = 'scoped memory for tpu_custom_call.1']
    %8 = vsyncpa [#allocation3], 0
    // Predicated region
    $region2: #{tpu_custom_call.1} parent=1 // pred_check
      _
    $region3: #{tpu_custom_call.1} parent=1 // pred_check_branch
      %10 = sbr.rel (0) target = $region5
    $region4: #{tpu_custom_call.1} parent=1 // pred_region
      _
    $region5: #{tpu_custom_call.1} parent=1 // pred_fallthru
      _
    // Predicated region
    $region6: #{tpu_custom_call.1} parent=1 // pred_check
      _
    $region7: #{tpu_custom_call.1} parent=1 // pred_check_branch
      %12 = sbr.rel (0) target = $region9
    $region8: #{tpu_custom_call.1} parent=1 // pred_region
      _
    $region9: #{tpu_custom_call.1} parent=1 // pred_fallthru
      _
    // Predicated region
    $region10: #{tpu_custom_call.1} parent=1 // pred_check
      _
    $region11: #{tpu_custom_call.1} parent=1 // pred_check_branch
      %14 = sbr.rel (0) target = $region13
    $region12: #{tpu_custom_call.1} parent=1 // pred_region
      _
    $region13: #{tpu_custom_call.1} parent=1 // pred_fallthru
      _
    %v15 = vld [vmem:[%s0] sm:$0xff]
    %v16 = vld [vmem:[%s0 + $0x8] sm:$0xff]
    %v17 = vld [vmem:[%s1] sm:$0xff]
    %v18 = vld [vmem:[%s1 + $0x8] sm:$0xff]
    %v19 = vld [vmem:[%s1 + $0x10] sm:$0xff]
    %v20 = vld [vmem:[%s1 + $0x18] sm:$0xff]
    %v21 = vld [vmem:[%s1 + $0x20] sm:$0xff]
    %v22 = vld [vmem:[%s1 + $0x28] sm:$0xff]
    %v23 = vld [vmem:[%s1 + $0x30] sm:$0xff]
    %v24 = vld [vmem:[%s1 + $0x38] sm:$0xff]
    %v25 = vld [vmem:[%s1 + $0x40] sm:$0xff]
    %v26 = vld [vmem:[%s1 + $0x48] sm:$0xff]
    %v27 = vld [vmem:[%s1 + $0x50] sm:$0xff]
    %v28 = vld [vmem:[%s1 + $0x58] sm:$0xff]
    %v29 = vld [vmem:[%s2] sm:$0x1]
    %v31 = vlaneseq
    %v32 = vshrl.u32 %v31, 7
    %v33 = vsub.s32 0, %v32
    %v34 = vrot.slane %v29, %v33
    %vm36 = vcmask 261120
    %v38 = vsel %vm36, %v15, 0
    %v41 = vsel %vm36, %v16, 0
    %v44 = vsel %vm36, %v17, 0
    %v47 = vsel %vm36, %v18, 0
    %v50 = vsel %vm36, %v19, 0
    %v53 = vsel %vm36, %v20, 0
    %v56 = vsel %vm36, %v21, 0
    %v59 = vsel %vm36, %v22, 0
    %v62 = vsel %vm36, %v23, 0
    %v65 = vsel %vm36, %v24, 0
    %v68 = vsel %vm36, %v25, 0
    %v71 = vsel %vm36, %v26, 0
    %v74 = vsel %vm36, %v27, 0
    %v77 = vsel %vm36, %v28, 0
    %79 = vmatprep.subr.mxu0 0.0
    %80 = vmatpush1.xpose.msra.mxu0 0.0
    %81 = vmatprep.subr.mxu0 0.0
    %82 = vmatpush1.xpose.msra.mxu0 0.0
    %83 = vmatprep.subr.mxu0 0.0
    %84 = vmatpush1.xpose.msra.mxu0 0.0
    %85 = vmatprep.subr.mxu0 0.0
    %86 = vmatpush1.xpose.msra.mxu0 0.0
    %87 = vmatprep.subr.mxu0 0.0
    %88 = vmatpush1.xpose.msra.mxu0 %v77
    %89 = vmatprep.subr.mxu0 0.0
    %90 = vmatpush1.xpose.msra.mxu0 %v74
    %91 = vmatprep.subr.mxu0 0.0
    %92 = vmatpush1.xpose.msra.mxu0 %v71
    %93 = vmatprep.subr.mxu0 0.0
    %94 = vmatpush1.xpose.msra.mxu0 %v68
    %95 = vmatprep.subr.mxu0 0.0
    %96 = vmatpush1.xpose.msra.mxu0 %v65
    %97 = vmatprep.subr.mxu0 0.0
    %98 = vmatpush1.xpose.msra.mxu0 %v62
    %99 = vmatprep.subr.mxu0 0.0
    %100 = vmatpush1.xpose.msra.mxu0 %v59
    %101 = vmatprep.subr.mxu0 0.0
    %102 = vmatpush1.xpose.msra.mxu0 %v56
    %103 = vmatprep.subr.mxu0 0.0
    %104 = vmatpush1.xpose.msra.mxu0 %v53
    %105 = vmatprep.subr.mxu0 0.0
    %106 = vmatpush1.xpose.msra.mxu0 %v50
    %107 = vmatprep.subr.mxu0 0.0
    %108 = vmatpush1.xpose.msra.mxu0 %v47
    %109 = vmatprep.subr.mxu0 0.0
    %110 = vmatpush1.xpose.msra.mxu0 %v44
    %111 = vmatprep.subr.mxu0 0.0
    %112 = vmatpush2.xpose.msra.mxu0 0.0
    %113 = vmatprep.subr.mxu0 0.0
    %114 = vmatpush2.xpose.msra.mxu0 0.0
    %115 = vmatprep.subr.mxu0 0.0
    %116 = vmatpush2.xpose.msra.mxu0 0.0
    %117 = vmatprep.subr.mxu0 0.0
    %118 = vmatpush2.xpose.msra.mxu0 0.0
    %119 = vmatprep.subr.mxu0 0.0
    %120 = vmatpush2.xpose.msra.mxu0 0.0
    %121 = vmatprep.subr.mxu0 0.0
    %122 = vmatpush2.xpose.msra.mxu0 0.0
    %123 = vmatprep.subr.mxu0 0.0
    %124 = vmatpush2.xpose.msra.mxu0 0.0
    %125 = vmatprep.subr.mxu0 0.0
    %126 = vmatpush2.xpose.msra.mxu0 0.0
    %127 = vmatprep.subr.mxu0 0.0
    %128 = vmatpush2.xpose.msra.mxu0 0.0
    %129 = vmatprep.subr.mxu0 0.0
    %130 = vmatpush2.xpose.msra.mxu0 0.0
    %131 = vmatprep.subr.mxu0 0.0
    %132 = vmatpush2.xpose.msra.mxu0 0.0
    %133 = vmatprep.subr.mxu0 0.0
    %134 = vmatpush2.xpose.msra.mxu0 0.0
    %135 = vmatprep.subr.mxu0 0.0
    %136 = vmatpush2.xpose.msra.mxu0 0.0
    %137 = vmatprep.subr.mxu0 0.0
    %138 = vmatpush2.xpose.msra.mxu0 0.0
    %139 = vmatprep.subr.mxu0 0.0
    %140 = vmatpush2.xpose.msra.mxu0 0.0
    %141 = vmatprep.subr.mxu0 0.0
    %142 = vmatpush2.xpose.msra.mxu0 0.0
    %143 = vmatprep.mubr.f32.mxu0 0.0
    %144 = vmatmul.mubr.f32.gmra.mxu0 %v38
    %v145 = vpop.f32.mrf.mxu0
    %v146 = vadd.f32 %v34, %v145
    %v147 = vpop.f32.mrf.mxu0
    %148 = vmatprep.mubr.f32.mxu0 0.0
    %149 = vmatmul.mubr.f32.gmra.mxu0 %v41
    %v150 = vpop.f32.mrf.mxu0
    %v151 = vadd.f32 %v34, %v150
    %v152 = vpop.f32.mrf.mxu0
    %153 = vdwg.mxu0
    %vm154 = vcmask 785408
    %155 = vst.msk [vmem:[#allocation2] sm:$0xff] %vm154, %v146
    %156 = vst.msk [vmem:[#allocation2 + $0x8] sm:$0xff] %vm154, %v151
    // Predicated region
    $region14: #{tpu_custom_call.1} parent=1 // pred_check
      _
    $region15: #{tpu_custom_call.1} parent=1 // pred_check_branch
      %158 = sbr.rel (0) target = $region17
    $region16: #{tpu_custom_call.1} parent=1 // pred_region
      %s160 = ssub.s32 256, 256
      %161 = vsyncadd [#allocation3], %s160
      %s162 = sshll.u32 [#allocation2], 4
      %s163 = int_to_ptr.vmem [resolvable:$true] %s162
      %168 = dma.vmem_to_hbm [thread:$0]  %s163, 256, %s3, [#allocation3], 128, 128, 8
    $region17: #{tpu_custom_call.1} parent=1 // pred_fallthru
      _
    // Predicated region
    $region18: #{tpu_custom_call.1} parent=1 // pred_check
      _
    $region19: #{tpu_custom_call.1} parent=1 // pred_check_branch
      %170 = sbr.rel (0) target = $region21
    $region20: #{tpu_custom_call.1} parent=1 // pred_region
      %171 = dma.done [#allocation3], 256
    $region21: #{tpu_custom_call.1} parent=1 // pred_fallthru
      _
    %172 = vsyncpa [#allocation3], 1

</llo_original>
